<compile_context>
chip_gen: v7x
topology: tpu7x:2x2x1
jax: 0.10.0
libtpu: 0.0.40
codegen_flags: <defaults>
</compile_context>

<pallas_src>
import math

import jax
import jax.numpy as jnp
from jax.experimental import pallas as pl
from jax.experimental.pallas import tpu as pltpu


def _pe_add_kernel(x_ref, pe_ref, o_ref):
    # x_ref / o_ref: (tb, tf); pe_ref: (1, tf) or (tb, tf) (fold path) — broadcasts.
    o_ref[...] = (x_ref[...] + pe_ref[...]).astype(o_ref.dtype)


def make_positional_encoding_table(dim_model: int, seq_length: int,
                                   dtype=jnp.float32) -> jnp.ndarray:
    """Sinusoidal PE buffer, identical to the PyTorch __init__ (plain JAX glue)."""
    position = jnp.arange(seq_length, dtype=jnp.float32)[:, None]            # (L, 1)
    div_term = jnp.exp(
        jnp.arange(0, dim_model, 2, dtype=jnp.float32) * (-math.log(10000.0) / dim_model)
    )                                                                         # (D/2,)
    angles = position * div_term                                              # (L, D/2)
    pe = jnp.zeros((seq_length, dim_model), dtype=jnp.float32)
    pe = pe.at[:, 0::2].set(jnp.sin(angles))
    pe = pe.at[:, 1::2].set(jnp.cos(angles))
    return pe.astype(dtype)


def _sublane_multiple(itemsize: int) -> int:
    # Sub-32-bit dtypes pack along sublanes: keep row tiles full-width packed.
    return {4: 8, 2: 16, 1: 32}.get(itemsize, 8)


def _default_block_bytes() -> int:
    # 4 MiB is near the bandwidth plateau on v5e/v6e; on 64-MiB-VMEM parts (v7x,
    # ~3.2 TB/s HBM) push to 6 MiB so the ~0.35 us/step overhead stays <10%.
    try:
        info = pltpu.get_tpu_info()
        vmem = getattr(info, "vmem_capacity_bytes", None)
        if vmem is not None and vmem <= 64 * 1024 * 1024:
            return 6 * 1024 * 1024
    except Exception:
        pass
    return 4 * 1024 * 1024


def _choose_tiles(R: int, F: int, budget_elems: int, sub: int):
    """Pick (tb, tf): tb multiple of `sub` or == R; tf multiple of 128 or == F;
    tb * tf <= budget_elems (no 8x overshoot)."""
    if R * F <= budget_elems:
        return R, F                                   # single block, always legal
    row_min = min(sub, R)
    cap = max(128, budget_elems // row_min)           # leave room for >= row_min rows
    tf = F if F <= cap else max(128, (cap // 128) * 128)
    rows = max(1, budget_elems // tf)
    if rows >= R:
        tb = R                                        # full row dim: always legal
    else:
        tb = max(sub, (rows // sub) * sub)            # multiple of sublane packing
    return tb, tf


def positional_encoding_forward(x: jnp.ndarray, pe: jnp.ndarray, *,
                                block_bytes: int | None = None,
                                force_pallas: bool = False) -> jnp.ndarray:
    """x: (B, L, D).  pe: (seq_length, D) table.  Returns x + pe[:L]."""
    B, L, D = x.shape
    pe_sliced = pe[:L, :].astype(x.dtype)   # static slice + dtype match (wrapper glue)

    # Tiny workloads: pallas_call fixed launch + per-step overhead dwarfs the add;
    # let XLA fuse it into neighbouring ops instead.
    if not force_pallas and x.size < (1 << 15):
        return x + pe_sliced[None, :, :]

    if block_bytes is None:
        block_bytes = _default_block_bytes()

    itemsize = x.dtype.itemsize
    sub = _sublane_multiple(itemsize)

    # Small-batch fold: merge g sequence chunks into the row axis so tiles have
    # >= `sub` rows. Requires g | L, g % sub == 0, and a lane-dense feature dim.
    g = 1
    if B < sub:
        for cand in range(sub, L + 1, sub):
            if L % cand == 0 and ((L // cand) * D) % 128 == 0:
                g = cand
                break

    R = B * g                   # row axis of the flattened view
    F = (L // g) * D            # lane-dense flattened feature axis
    x2 = x.reshape(R, F)
    pe2 = pe_sliced.reshape(g, F)

    budget_elems = max(sub * 128, min(block_bytes, 12 * 1024 * 1024) // itemsize)
    if g > 1:
        # Fold path: exactly one batch per row block (tb == g) so the PE block
        # (g, tf) lines up element-wise with the x block.
        tb = g
        cap = max(128, budget_elems // g)
        tf = F if F <= cap else max(128, (cap // 128) * 128)
    else:
        tb, tf = _choose_tiles(R, F, budget_elems, sub)

    # Batch axis innermost so the PE block index is constant between steps
    # (Pallas skips the re-fetch); feature axis outermost.
    grid = (pl.cdiv(F, tf), pl.cdiv(R, tb))

    # Make sure a second TensorCore (v7x megacore) gets work when the problem
    # would otherwise collapse to a single block.
    if grid == (1, 1) and R * F * itemsize >= (1 << 20):
        if g == 1 and R >= 2 * sub:
            tb = max(sub, ((R // 2) // sub) * sub)
        elif F >= 256:
            tf = max(128, ((F // 2) // 128) * 128)
        grid = (pl.cdiv(F, tf), pl.cdiv(R, tb))

    # VMEM limit sized from actual usage: double-buffered x + out tiles,
    # double-buffered PE tile, plus slack. Capped well under v7x's 64 MiB.
    vmem_need = (4 * tb * tf + 2 * g * tf) * itemsize + (2 << 20)
    vmem_limit = int(min(56 * 1024 * 1024, max(vmem_need, 16 * 1024 * 1024)))

    out2 = pl.pallas_call(
        _pe_add_kernel,
        out_shape=jax.ShapeDtypeStruct((R, F), x.dtype),
        grid_spec=pltpu.PrefetchScalarGridSpec(
            num_scalar_prefetch=0,
            grid=grid,
            in_specs=[
                pl.BlockSpec((tb, tf), lambda j, i: (i, j)),   # x tile
                pl.BlockSpec((g, tf), lambda j, i: (0, j)),    # PE tile: constant in batch
            ],
            out_specs=pl.BlockSpec((tb, tf), lambda j, i: (i, j)),
        ),
        compiler_params=pltpu.CompilerParams(
            dimension_semantics=("parallel", "parallel"),
            vmem_limit_bytes=vmem_limit,
        ),
    )(x2, pe2)

    return out2.reshape(B, L, D)


if __name__ == "__main__":
    # Shapes consistent with the module: dim_model=32, seq_length=8, batch=2.
    dim_model, seq_length, batch = 32, 8, 2

    key = jax.random.PRNGKey(0)
    x = jax.random.normal(key, (batch, seq_length, dim_model), dtype=jnp.float32)
    pe = make_positional_encoding_table(dim_model, seq_length)

    out = positional_encoding_forward(x, pe, force_pallas=True)
    out = jax.block_until_ready(out)

    ref = x + pe[None, :seq_length, :]
    assert out.shape == x.shape
    assert jnp.allclose(out, ref, atol=1e-6), "mismatch vs reference (demo shape)"

    # Check 2: multi-feature-block path (ragged-friendly tiling, PE resident across
    # the inner batch axis) with a tiny per-block budget.
    k2 = jax.random.PRNGKey(1)
    x_big = jax.random.normal(k2, (3, 24, 64), dtype=jnp.float32)   # F = 1536
    pe_big = make_positional_encoding_table(64, 24)
    out_big = positional_encoding_forward(x_big, pe_big, block_bytes=4096,
                                          force_pallas=True)
    out_big = jax.block_until_ready(out_big)
    ref_big = x_big + pe_big[None, :, :]
    assert jnp.allclose(out_big, ref_big, atol=1e-6), "mismatch vs reference (tiled shape)"

    # Check 3: small-batch fold path (B=2 < 8, L=32 foldable with g=8 -> rows=16).
    k3 = jax.random.PRNGKey(2)
    x_fold = jax.random.normal(k3, (2, 32, 64), dtype=jnp.float32)
    pe_fold = make_positional_encoding_table(64, 32)
    out_fold = positional_encoding_forward(x_fold, pe_fold, force_pallas=True)
    out_fold = jax.block_until_ready(out_fold)
    ref_fold = x_fold + pe_fold[None, :, :]
    assert jnp.allclose(out_fold, ref_fold, atol=1e-6), "mismatch vs reference (fold path)"

    print("KERNEL_OK")
</pallas_src>

<mosaic_0001>
module attributes {stable_mosaic.version = 11 : i64} {
  func.func @_pe_add_kernel(%arg0: i32, %arg1: i32, %arg2: memref<2x256xf32, #tpu.memory_space<vmem>>, %arg3: memref<1x256xf32, #tpu.memory_space<vmem>>, %arg4: memref<2x256xf32, #tpu.memory_space<vmem>>) attributes {dimension_semantics = [#tpu.dimension_semantics<parallel>, #tpu.dimension_semantics<parallel>], iteration_bounds = array<i64: 1, 1>, scalar_prefetch = 0 : i64, scratch_operands = 0 : i64, tpu.core_type = #tpu.core_type<tc>, window_params = [{transform_indices = @transform_0, window_bounds = array<i64: 2, 256>}, {transform_indices = @transform_1, window_bounds = array<i64: 1, 256>}, {transform_indices = @transform_2, window_bounds = array<i64: 2, 256>}]} {
    %c0 = arith.constant 0 : index
    %c0_0 = arith.constant 0 : index
    %0 = vector.load %arg2[%c0, %c0_0] : memref<2x256xf32, #tpu.memory_space<vmem>>, vector<2x256xf32>
    %c0_1 = arith.constant 0 : index
    %c0_2 = arith.constant 0 : index
    %1 = vector.load %arg3[%c0_1, %c0_2] : memref<1x256xf32, #tpu.memory_space<vmem>>, vector<1x256xf32>
    %2 = vector.broadcast %1 : vector<1x256xf32> to vector<2x256xf32>
    %3 = arith.addf %0, %2 : vector<2x256xf32>
    %c0_3 = arith.constant 0 : index
    %c0_4 = arith.constant 0 : index
    %4 = vector.load %arg4[%c0_3, %c0_4] : memref<2x256xf32, #tpu.memory_space<vmem>>, vector<2x256xf32>
    tpu.vector_store %arg4[%c0_3, %c0_4], %3 {strides = array<i32>} : memref<2x256xf32, #tpu.memory_space<vmem>>, vector<2x256xf32>,
    return
  }
  func.func @transform_0(%arg0: i32, %arg1: i32) -> (i32, i32) {
    %c0_i32 = arith.constant 0 : i32
    return %arg1, %arg0 : i32, i32
  }
  func.func @transform_1(%arg0: i32, %arg1: i32) -> (i32, i32) {
    %c0_i32 = arith.constant 0 : i32
    %c0_i32_0 = arith.constant 0 : i32
    return %c0_i32, %arg0 : i32, i32
  }
  func.func @transform_2(%arg0: i32, %arg1: i32) -> (i32, i32) {
    %c0_i32 = arith.constant 0 : i32
    return %arg1, %arg0 : i32, i32
  }
}

</mosaic_0001>

<llo_original>
// kernel: tpu_custom_call.1
$region0: #{tpu_custom_call.1}
  #allocation0 [shape = 'u32[]', space=smem, size = 0x4, offset = 0x4, fixed_abs, tag = 'smem constant byte address 0x4 - core index']
  #allocation1 [shape = 'u32[144,128]{1,0:T(1,128)}', space=vmem, size = 0x12000, scoped, tag = 'internal scratch']
  %s0 = inlined_call_operand.hbm [shape: f32[2,256], index: 0, kind: input, shape index: {}]
  %s1 = inlined_call_operand.vmem [shape: f32[1,256], index: 1, kind: input, shape index: {}]
  %s2 = inlined_call_operand.hbm [shape: f32[2,256], index: 2, kind: output, shape index: {}]
  %s3 = sld [smem:[#allocation0]]
  $region22: #{tpu_custom_call.1} parent=0
    _
  %s5 = ssub.s32 1, %s3
  %s6 = scalar_select 0, %s5, %s3
  $region1: #{tpu_custom_call.1} parent=0
    #allocation2 [shape = 'u8[2048]{0}', space=vmem, size = 0x800, scoped, tag = 'input window, operand 0, single buffered']
    #allocation3 [shape = 's32[1]{0}', space=sflag, size = 0x4, scoped, tag = 'scoped memory for tpu_custom_call.1']
    #allocation4 [shape = 's32[1]{0}', space=sflag, size = 0x4, scoped, tag = 'scoped memory for tpu_custom_call.1']
    #allocation5 [shape = 'u8[2048]{0}', space=vmem, size = 0x800, scoped, tag = 'output window, operand 0, single buffered']
    %7 = vsyncpa [#allocation3], 0
    %8 = vsyncpa [#allocation4], 0
    // Predicated region
    $region2: #{tpu_custom_call.1} parent=1 // pred_check
      _
    $region3: #{tpu_custom_call.1} parent=1 // pred_check_branch
      %10 = sbr.rel (0) target = $region5
    $region4: #{tpu_custom_call.1} parent=1 // pred_region
      %s12 = ssub.s32 64, 64
      %13 = vsyncadd [#allocation3], %s12
      %s15 = sshll.u32 [#allocation2], 4
      %s16 = int_to_ptr.vmem [resolvable:$true] %s15
      %18 = dma.hbm_to_vmem [thread:$0]  %s0, 64, %s16, [#allocation3]
    $region5: #{tpu_custom_call.1} parent=1 // pred_fallthru
      _
    // Predicated region
    $region6: #{tpu_custom_call.1} parent=1 // pred_check
      _
    $region7: #{tpu_custom_call.1} parent=1 // pred_check_branch
      %20 = sbr.rel (0) target = $region9
    $region8: #{tpu_custom_call.1} parent=1 // pred_region
      _
    $region9: #{tpu_custom_call.1} parent=1 // pred_fallthru
      _
    // Predicated region
    $region10: #{tpu_custom_call.1} parent=1 // pred_check
      _
    $region11: #{tpu_custom_call.1} parent=1 // pred_check_branch
      %22 = sbr.rel (0) target = $region13
    $region12: #{tpu_custom_call.1} parent=1 // pred_region
      %23 = dma.done [#allocation3], 64
    $region13: #{tpu_custom_call.1} parent=1 // pred_fallthru
      _
    %v24 = vld [vmem:[#allocation2] sm:$0xf]
    %v25 = vld [vmem:[%s1] sm:$0x3]
    %v27 = vlaneseq
    %v28 = vshrl.u32 %v27, 7
    %v29 = vsub.s32 0, %v28
    %v30 = vrot.slane %v25, %v29
    %v31 = vlaneseq
    %v32 = vshrl.u32 %v31, 7
    %v33 = vsub.s32 1, %v32
    %v34 = vrot.slane %v25, %v33
    %v35 = vcombine.low %v30, %v34
    %v37 = vunpack.c.l.s4 1983009808
    %v38 = vunpack.c.0.s8 %v37
    %v39 = vlaneseq
    %v40 = vshrl.u32 %v39, 7
    %v41 = vsub.s32 %v38, %v40
    %v42 = vrot.slane %v35, %v41
    %v44 = vadd.f32 %v24, %v42
    %45 = vst [vmem:[#allocation5] sm:$0xf] %v44
    // Predicated region
    $region14: #{tpu_custom_call.1} parent=1 // pred_check
      _
    $region15: #{tpu_custom_call.1} parent=1 // pred_check_branch
      %47 = sbr.rel (0) target = $region17
    $region16: #{tpu_custom_call.1} parent=1 // pred_region
      %s49 = ssub.s32 64, 64
      %50 = vsyncadd [#allocation4], %s49
      %s52 = sshll.u32 [#allocation5], 4
      %s53 = int_to_ptr.vmem [resolvable:$true] %s52
      %55 = dma.vmem_to_hbm [thread:$0]  %s53, 64, %s2, [#allocation4]
    $region17: #{tpu_custom_call.1} parent=1 // pred_fallthru
      _
    // Predicated region
    $region18: #{tpu_custom_call.1} parent=1 // pred_check
      _
    $region19: #{tpu_custom_call.1} parent=1 // pred_check_branch
      %57 = sbr.rel (0) target = $region21
    $region20: #{tpu_custom_call.1} parent=1 // pred_region
      %58 = dma.done [#allocation4], 64
    $region21: #{tpu_custom_call.1} parent=1 // pred_fallthru
      _
    %59 = vsyncpa [#allocation3], 1
    %60 = vsyncpa [#allocation4], 1

</llo_original>
